<compile_context>
chip_gen: v7x
topology: tpu7x:2x2x1
jax: 0.10.0
libtpu: 0.0.40
codegen_flags: <defaults>
</compile_context>

<pallas_src>
import functools

import jax
import jax.numpy as jnp
from jax import lax
from jax.experimental import pallas as pl
from jax.experimental.pallas import tpu as pltpu


def _round_up(x, m):
    return ((x + m - 1) // m) * m


# ----------------------------------------------------------------------------
# Pallas kernel: one batch tile, pos + neg scored together, user tile shared.
# ----------------------------------------------------------------------------
def _nmf_score_kernel(
    u_gmf_ref, u_mlp_ref,            # (TB, Dp) bf16  shared user embeddings
    ip_gmf_ref, ip_mlp_ref,          # (TB, Dp) bf16  positive item embeddings
    in_gmf_ref, in_mlp_ref,          # (TB, Dp) bf16  negative item embeddings
    w1u_ref, w1i_ref, b1_ref,        # (Dp,H1) bf16, (Dp,H1) bf16, (1,H1) f32
    w2_ref, b2_ref,                  # (H1,H2) bf16, (1,H2) f32
    w3_ref, b3_ref,                  # (H2,H3) bf16, (1,H3) f32
    wog_ref, wom_ref, bo_ref,        # (1,Dp) bf16, (1,H3) bf16, (1,1) f32
    out_ref,                         # (2, TB) f32 -- lane-dense scores
):
    f32 = jnp.float32
    bf16 = jnp.bfloat16

    # --- MLP layer 1, user half: computed ONCE and shared by pos & neg ------
    hu = jnp.dot(u_mlp_ref[...], w1u_ref[...], preferred_element_type=f32)

    def mlp_branch(i_mlp):
        # concat([u, i]) @ W1 == u @ W1_top + i @ W1_bot
        h = hu + jnp.dot(i_mlp, w1i_ref[...], preferred_element_type=f32) + b1_ref[...]
        h = jnp.maximum(h, 0.0).astype(bf16)                        # (TB, H1)
        h = jnp.dot(h, w2_ref[...], preferred_element_type=f32) + b2_ref[...]
        h = jnp.maximum(h, 0.0).astype(bf16)                        # (TB, H2)
        h = jnp.dot(h, w3_ref[...], preferred_element_type=f32) + b3_ref[...]
        return jnp.maximum(h, 0.0).astype(bf16)                     # (TB, H3)

    h_pos = mlp_branch(ip_mlp_ref[...])
    h_neg = mlp_branch(in_mlp_ref[...])

    # --- GMF branch: elementwise product (shared user tile) -----------------
    gmf_pos = u_gmf_ref[...] * ip_gmf_ref[...]                       # (TB, Dp)
    gmf_neg = u_gmf_ref[...] * in_gmf_ref[...]

    # --- Output layer: concat([gmf, h]) @ Wout + b ---------------------------
    # Computed as (1, D) x (TB, D)^T so results land lane-dense as (1, TB)
    # rows (no masked N=1 column stores).
    dn = (((1,), (1,)), ((), ()))
    def score(gmf, h):
        return (lax.dot_general(wog_ref[...], gmf, dn, preferred_element_type=f32)
                + lax.dot_general(wom_ref[...], h, dn, preferred_element_type=f32)
                + bo_ref[...])                                       # (1, TB)

    out_ref[...] = jnp.concatenate([score(gmf_pos, h_pos),
                                    score(gmf_neg, h_neg)], axis=0)  # (2, TB)


# ----------------------------------------------------------------------------
# Wrapper: pads indices, gathers bf16 rows, builds BlockSpecs, runs the kernel.
# ----------------------------------------------------------------------------
def neural_mf_forward(params, user_indices, pos_item_indices, neg_item_indices,
                      *, tb=1024):
    """Mirrors NeuralMF.forward: returns (pos_score, neg_score), each (B,) f32."""
    n = user_indices.shape[0]

    # --- choose an effective batch tile --------------------------------------
    if n <= tb:
        if n >= 256:
            # split into (at least) 2 tiles so v7x's two TensorCores both work
            tb_eff = _round_up((n + 1) // 2, 128)
        else:
            tb_eff = _round_up(n, 8)           # single tile, sublane aligned
    else:
        tb_eff = tb                            # must be a multiple of 128
        assert tb_eff % 128 == 0
    n_pad = _round_up(n, tb_eff)
    num_tiles = n_pad // tb_eff

    # --- pad the INDEX vectors (not the activations), then gather bf16 rows --
    def pad_idx(idx):
        if n_pad != n:
            idx = jnp.pad(idx, (0, n_pad - n))   # index 0 is a valid row
        return idx

    uidx = pad_idx(user_indices)
    pidx = pad_idx(pos_item_indices)
    nidx = pad_idx(neg_item_indices)

    # tables are already (.., Dp) bf16 -> activations need no pad/cast passes
    u_gmf = params["emb_user_gmf"][uidx]
    u_mlp = params["emb_user_mlp"][uidx]
    ip_gmf = params["emb_item_gmf"][pidx]
    ip_mlp = params["emb_item_mlp"][pidx]
    in_gmf = params["emb_item_gmf"][nidx]
    in_mlp = params["emb_item_mlp"][nidx]
    acts = (u_gmf, u_mlp, ip_gmf, ip_mlp, in_gmf, in_mlp)

    weights = (
        params["w1u"], params["w1i"], params["b1"],
        params["w2"], params["b2"],
        params["w3"], params["b3"],
        params["wo_gmf_row"], params["wo_mlp_row"], params["bo"],
    )

    dp = u_gmf.shape[1]
    h1 = params["w2"].shape[0]
    h2 = params["w3"].shape[0]
    h3 = params["w3"].shape[1]

    # Activations: one (TB, Dp) block per grid step (pipelined/double-buffered).
    act_spec = pl.BlockSpec((tb_eff, dp), lambda i: (i, 0))

    # Weights: constant block index -> fetched once, resident in VMEM.
    def resident(shape):
        nd = len(shape)
        return pl.BlockSpec(shape, lambda i, nd=nd: (0,) * nd)

    in_specs = [act_spec] * 6 + [resident(w.shape) for w in weights]

    flops = n_pad * (2 * dp * h1                                    # user half, once
                     + 2 * (2 * dp * h1 + 2 * h1 * h2 + 2 * h2 * h3 # item half + MLP x2
                            + dp + 2 * (dp + h3)))                  # gmf + output x2
    bytes_accessed = int(
        sum(int(a.size) * 2 for a in acts)
        + sum(int(w.size) * w.dtype.itemsize for w in weights)
        + 2 * n_pad * 4)

    out = pl.pallas_call(
        _nmf_score_kernel,
        out_shape=jax.ShapeDtypeStruct((2, n_pad), jnp.float32),
        grid_spec=pltpu.PrefetchScalarGridSpec(
            num_scalar_prefetch=0,
            grid=(num_tiles,),
            in_specs=in_specs,
            out_specs=pl.BlockSpec((2, tb_eff), lambda i: (0, i)),
        ),
        compiler_params=pltpu.CompilerParams(
            dimension_semantics=("parallel",)),
        cost_estimate=pl.CostEstimate(
            flops=int(flops), transcendentals=0, bytes_accessed=bytes_accessed),
    )(*acts, *weights)

    return out[0, :n], out[1, :n]


# ----------------------------------------------------------------------------
# Parameter construction (PyTorch-like init; tables/weights stored kernel-ready:
# embedding dim lane-padded to 128, matmul operands in bf16, biases in f32).
# ----------------------------------------------------------------------------
def init_params(key, num_users, num_items, embedding_dim=100,
                hidden_layers=(64, 32, 16)):
    D = embedding_dim
    Dp = _round_up(D, 128)                 # lane-pad to a multiple of 128
    H1, H2, H3 = hidden_layers
    ks = iter(jax.random.split(key, 8))
    bf16 = jnp.bfloat16

    def emb(k, nrows):
        t = 0.01 * jax.random.normal(k, (nrows, D), jnp.float32)
        return jnp.pad(t, ((0, 0), (0, Dp - D))).astype(bf16)

    def linear(k, fan_in, fan_out):
        # PyTorch nn.Linear default: U(-1/sqrt(fan_in), 1/sqrt(fan_in))
        kw, kb = jax.random.split(k)
        bound = 1.0 / jnp.sqrt(fan_in)
        w = jax.random.uniform(kw, (fan_in, fan_out), jnp.float32, -bound, bound)
        b = jax.random.uniform(kb, (fan_out,), jnp.float32, -bound, bound)
        return w, b

    p = {}
    p["emb_user_gmf"] = emb(next(ks), num_users)
    p["emb_item_gmf"] = emb(next(ks), num_items)
    p["emb_user_mlp"] = emb(next(ks), num_users)
    p["emb_item_mlp"] = emb(next(ks), num_items)

    # MLP layer 1: (2D -> H1), split into user-half / item-half, zero-pad rows.
    w1, b1 = linear(next(ks), 2 * D, H1)
    p["w1u"] = jnp.pad(w1[:D], ((0, Dp - D), (0, 0))).astype(bf16)
    p["w1i"] = jnp.pad(w1[D:], ((0, Dp - D), (0, 0))).astype(bf16)
    p["b1"] = b1.reshape(1, H1)

    w2, b2 = linear(next(ks), H1, H2)
    p["w2"], p["b2"] = w2.astype(bf16), b2.reshape(1, H2)

    w3, b3 = linear(next(ks), H2, H3)
    p["w3"], p["b3"] = w3.astype(bf16), b3.reshape(1, H3)

    # Output layer: (D + H3 -> 1), split into gmf-part / mlp-part, stored as
    # ROW vectors so the kernel's final dot is lane-dense.
    wo, bo = linear(next(ks), D + H3, 1)
    p["wo_gmf_row"] = jnp.pad(wo[:D].T, ((0, 0), (0, Dp - D))).astype(bf16)  # (1, Dp)
    p["wo_mlp_row"] = wo[D:].T.astype(bf16)                                   # (1, H3)
    p["bo"] = bo.reshape(1, 1)
    return p


# ----------------------------------------------------------------------------
# Pure-JAX f32 reference (uses the same bf16-quantized params) for correctness.
# ----------------------------------------------------------------------------
def _reference_score(params, u_gmf, i_gmf, u_mlp, i_mlp):
    f32 = jnp.float32
    gmf = u_gmf.astype(f32) * i_gmf.astype(f32)
    h = jnp.maximum(
        u_mlp.astype(f32) @ params["w1u"].astype(f32)
        + i_mlp.astype(f32) @ params["w1i"].astype(f32) + params["b1"], 0.0)
    h = jnp.maximum(h @ params["w2"].astype(f32) + params["b2"], 0.0)
    h = jnp.maximum(h @ params["w3"].astype(f32) + params["b3"], 0.0)
    score = (gmf @ params["wo_gmf_row"].astype(f32).T
             + h @ params["wo_mlp_row"].astype(f32).T + params["bo"])
    return score[:, 0]


if __name__ == "__main__":
    num_users, num_items = 32, 48
    embedding_dim = 100
    batch = 8

    key = jax.random.PRNGKey(0)
    kp, ku, kpi, kni = jax.random.split(key, 4)
    params = init_params(kp, num_users, num_items, embedding_dim)

    user_idx = jax.random.randint(ku, (batch,), 0, num_users)
    pos_idx = jax.random.randint(kpi, (batch,), 0, num_items)
    neg_idx = jax.random.randint(kni, (batch,), 0, num_items)

    fwd = jax.jit(functools.partial(neural_mf_forward, tb=1024))
    pos_score, neg_score = fwd(params, user_idx, pos_idx, neg_idx)
    pos_score = jax.block_until_ready(pos_score)
    neg_score = jax.block_until_ready(neg_score)

    # correctness check against an f32 reference (kernel matmuls are bf16 with
    # f32 accumulation -> relaxed tolerance)
    u_gmf = params["emb_user_gmf"][user_idx]
    u_mlp = params["emb_user_mlp"][user_idx]
    ref_pos = _reference_score(params, u_gmf, params["emb_item_gmf"][pos_idx],
                               u_mlp, params["emb_item_mlp"][pos_idx])
    ref_neg = _reference_score(params, u_gmf, params["emb_item_gmf"][neg_idx],
                               u_mlp, params["emb_item_mlp"][neg_idx])

    assert pos_score.shape == (batch,) and neg_score.shape == (batch,)
    assert jnp.allclose(pos_score, ref_pos, atol=1e-2, rtol=5e-2)
    assert jnp.allclose(neg_score, ref_neg, atol=1e-2, rtol=5e-2)

    print("KERNEL_OK")
</pallas_src>

<mosaic_0001>
module attributes {stable_mosaic.version = 11 : i64} {
  func.func @_nmf_score_kernel(%arg0: i32, %arg1: memref<8x128xbf16, #tpu.memory_space<vmem>>, %arg2: memref<8x128xbf16, #tpu.memory_space<vmem>>, %arg3: memref<8x128xbf16, #tpu.memory_space<vmem>>, %arg4: memref<8x128xbf16, #tpu.memory_space<vmem>>, %arg5: memref<8x128xbf16, #tpu.memory_space<vmem>>, %arg6: memref<8x128xbf16, #tpu.memory_space<vmem>>, %arg7: memref<128x64xbf16, #tpu.memory_space<vmem>>, %arg8: memref<128x64xbf16, #tpu.memory_space<vmem>>, %arg9: memref<1x64xf32, #tpu.memory_space<vmem>>, %arg10: memref<64x32xbf16, #tpu.memory_space<vmem>>, %arg11: memref<1x32xf32, #tpu.memory_space<vmem>>, %arg12: memref<32x16xbf16, #tpu.memory_space<vmem>>, %arg13: memref<1x16xf32, #tpu.memory_space<vmem>>, %arg14: memref<1x128xbf16, #tpu.memory_space<vmem>>, %arg15: memref<1x16xbf16, #tpu.memory_space<vmem>>, %arg16: memref<1x1xf32, #tpu.memory_space<vmem>>, %arg17: memref<2x8xf32, #tpu.memory_space<vmem>>) attributes {dimension_semantics = [#tpu.dimension_semantics<parallel>], iteration_bounds = array<i64: 1>, scalar_prefetch = 0 : i64, scratch_operands = 0 : i64, tpu.core_type = #tpu.core_type<tc>, window_params = [{transform_indices = @transform_0, window_bounds = array<i64: 8, 128>}, {transform_indices = @transform_1, window_bounds = array<i64: 8, 128>}, {transform_indices = @transform_2, window_bounds = array<i64: 8, 128>}, {transform_indices = @transform_3, window_bounds = array<i64: 8, 128>}, {transform_indices = @transform_4, window_bounds = array<i64: 8, 128>}, {transform_indices = @transform_5, window_bounds = array<i64: 8, 128>}, {pipeline_mode = #tpu.pipeline_mode<synchronous>, transform_indices = @transform_6, window_bounds = array<i64: 128, 64>}, {pipeline_mode = #tpu.pipeline_mode<synchronous>, transform_indices = @transform_7, window_bounds = array<i64: 128, 64>}, {pipeline_mode = #tpu.pipeline_mode<synchronous>, transform_indices = @transform_8, window_bounds = array<i64: 1, 64>}, {pipeline_mode = #tpu.pipeline_mode<synchronous>, transform_indices = @transform_9, window_bounds = array<i64: 64, 32>}, {pipeline_mode = #tpu.pipeline_mode<synchronous>, transform_indices = @transform_10, window_bounds = array<i64: 1, 32>}, {pipeline_mode = #tpu.pipeline_mode<synchronous>, transform_indices = @transform_11, window_bounds = array<i64: 32, 16>}, {pipeline_mode = #tpu.pipeline_mode<synchronous>, transform_indices = @transform_12, window_bounds = array<i64: 1, 16>}, {pipeline_mode = #tpu.pipeline_mode<synchronous>, transform_indices = @transform_13, window_bounds = array<i64: 1, 128>}, {pipeline_mode = #tpu.pipeline_mode<synchronous>, transform_indices = @transform_14, window_bounds = array<i64: 1, 16>}, {pipeline_mode = #tpu.pipeline_mode<synchronous>, transform_indices = @transform_15, window_bounds = array<i64: 1, 1>}, {transform_indices = @transform_16, window_bounds = array<i64: 2, 8>}]} {
    %c0 = arith.constant 0 : index
    %c0_0 = arith.constant 0 : index
    %0 = vector.load %arg2[%c0, %c0_0] : memref<8x128xbf16, #tpu.memory_space<vmem>>, vector<8x128xbf16>
    %c0_1 = arith.constant 0 : index
    %c0_2 = arith.constant 0 : index
    %1 = vector.load %arg7[%c0_1, %c0_2] : memref<128x64xbf16, #tpu.memory_space<vmem>>, vector<128x64xbf16>
    %cst = arith.constant dense<0.000000e+00> : vector<8x64xf32>
    %2 = tpu.matmul %0, %1, %cst {dimension_numbers = #tpu.dot_dimension_numbers<[1], [0], [0], [1], [0, 0, 1, 1], [], []>} : vector<8x128xbf16>, vector<128x64xbf16>, vector<8x64xf32> -> vector<8x64xf32>
    %c0_3 = arith.constant 0 : index
    %c0_4 = arith.constant 0 : index
    %3 = vector.load %arg4[%c0_3, %c0_4] : memref<8x128xbf16, #tpu.memory_space<vmem>>, vector<8x128xbf16>
    %c0_5 = arith.constant 0 : index
    %c0_6 = arith.constant 0 : index
    %4 = vector.load %arg8[%c0_5, %c0_6] : memref<128x64xbf16, #tpu.memory_space<vmem>>, vector<128x64xbf16>
    %cst_7 = arith.constant dense<0.000000e+00> : vector<8x64xf32>
    %5 = tpu.matmul %3, %4, %cst_7 {dimension_numbers = #tpu.dot_dimension_numbers<[1], [0], [0], [1], [0, 0, 1, 1], [], []>} : vector<8x128xbf16>, vector<128x64xbf16>, vector<8x64xf32> -> vector<8x64xf32>
    %6 = arith.addf %2, %5 : vector<8x64xf32>
    %c0_8 = arith.constant 0 : index
    %c0_9 = arith.constant 0 : index
    %7 = vector.load %arg9[%c0_8, %c0_9] : memref<1x64xf32, #tpu.memory_space<vmem>>, vector<1x64xf32>
    %8 = vector.broadcast %7 : vector<1x64xf32> to vector<8x64xf32>
    %9 = arith.addf %6, %8 : vector<8x64xf32>
    %cst_10 = arith.constant 0.000000e+00 : f32
    %10 = vector.broadcast %cst_10 : f32 to vector<8x64xf32>
    %11 = arith.maximumf %9, %10 : vector<8x64xf32>
    %12 = arith.truncf %11 : vector<8x64xf32> to vector<8x64xbf16>
    %c0_11 = arith.constant 0 : index
    %c0_12 = arith.constant 0 : index
    %13 = vector.load %arg10[%c0_11, %c0_12] : memref<64x32xbf16, #tpu.memory_space<vmem>>, vector<64x32xbf16>
    %cst_13 = arith.constant dense<0.000000e+00> : vector<8x32xf32>
    %14 = tpu.matmul %12, %13, %cst_13 {dimension_numbers = #tpu.dot_dimension_numbers<[1], [0], [0], [1], [0, 0, 1, 1], [], []>} : vector<8x64xbf16>, vector<64x32xbf16>, vector<8x32xf32> -> vector<8x32xf32>
    %c0_14 = arith.constant 0 : index
    %c0_15 = arith.constant 0 : index
    %15 = vector.load %arg11[%c0_14, %c0_15] : memref<1x32xf32, #tpu.memory_space<vmem>>, vector<1x32xf32>
    %16 = vector.broadcast %15 : vector<1x32xf32> to vector<8x32xf32>
    %17 = arith.addf %14, %16 : vector<8x32xf32>
    %cst_16 = arith.constant 0.000000e+00 : f32
    %18 = vector.broadcast %cst_16 : f32 to vector<8x32xf32>
    %19 = arith.maximumf %17, %18 : vector<8x32xf32>
    %20 = arith.truncf %19 : vector<8x32xf32> to vector<8x32xbf16>
    %c0_17 = arith.constant 0 : index
    %c0_18 = arith.constant 0 : index
    %21 = vector.load %arg12[%c0_17, %c0_18] : memref<32x16xbf16, #tpu.memory_space<vmem>>, vector<32x16xbf16>
    %cst_19 = arith.constant dense<0.000000e+00> : vector<8x16xf32>
    %22 = tpu.matmul %20, %21, %cst_19 {dimension_numbers = #tpu.dot_dimension_numbers<[1], [0], [0], [1], [0, 0, 1, 1], [], []>} : vector<8x32xbf16>, vector<32x16xbf16>, vector<8x16xf32> -> vector<8x16xf32>
    %c0_20 = arith.constant 0 : index
    %c0_21 = arith.constant 0 : index
    %23 = vector.load %arg13[%c0_20, %c0_21] : memref<1x16xf32, #tpu.memory_space<vmem>>, vector<1x16xf32>
    %24 = vector.broadcast %23 : vector<1x16xf32> to vector<8x16xf32>
    %25 = arith.addf %22, %24 : vector<8x16xf32>
    %cst_22 = arith.constant 0.000000e+00 : f32
    %26 = vector.broadcast %cst_22 : f32 to vector<8x16xf32>
    %27 = arith.maximumf %25, %26 : vector<8x16xf32>
    %28 = arith.truncf %27 : vector<8x16xf32> to vector<8x16xbf16>
    %c0_23 = arith.constant 0 : index
    %c0_24 = arith.constant 0 : index
    %29 = vector.load %arg6[%c0_23, %c0_24] : memref<8x128xbf16, #tpu.memory_space<vmem>>, vector<8x128xbf16>
    %c0_25 = arith.constant 0 : index
    %c0_26 = arith.constant 0 : index
    %30 = vector.load %arg8[%c0_25, %c0_26] : memref<128x64xbf16, #tpu.memory_space<vmem>>, vector<128x64xbf16>
    %cst_27 = arith.constant dense<0.000000e+00> : vector<8x64xf32>
    %31 = tpu.matmul %29, %30, %cst_27 {dimension_numbers = #tpu.dot_dimension_numbers<[1], [0], [0], [1], [0, 0, 1, 1], [], []>} : vector<8x128xbf16>, vector<128x64xbf16>, vector<8x64xf32> -> vector<8x64xf32>
    %32 = arith.addf %2, %31 : vector<8x64xf32>
    %c0_28 = arith.constant 0 : index
    %c0_29 = arith.constant 0 : index
    %33 = vector.load %arg9[%c0_28, %c0_29] : memref<1x64xf32, #tpu.memory_space<vmem>>, vector<1x64xf32>
    %34 = vector.broadcast %33 : vector<1x64xf32> to vector<8x64xf32>
    %35 = arith.addf %32, %34 : vector<8x64xf32>
    %cst_30 = arith.constant 0.000000e+00 : f32
    %36 = vector.broadcast %cst_30 : f32 to vector<8x64xf32>
    %37 = arith.maximumf %35, %36 : vector<8x64xf32>
    %38 = arith.truncf %37 : vector<8x64xf32> to vector<8x64xbf16>
    %c0_31 = arith.constant 0 : index
    %c0_32 = arith.constant 0 : index
    %39 = vector.load %arg10[%c0_31, %c0_32] : memref<64x32xbf16, #tpu.memory_space<vmem>>, vector<64x32xbf16>
    %cst_33 = arith.constant dense<0.000000e+00> : vector<8x32xf32>
    %40 = tpu.matmul %38, %39, %cst_33 {dimension_numbers = #tpu.dot_dimension_numbers<[1], [0], [0], [1], [0, 0, 1, 1], [], []>} : vector<8x64xbf16>, vector<64x32xbf16>, vector<8x32xf32> -> vector<8x32xf32>
    %c0_34 = arith.constant 0 : index
    %c0_35 = arith.constant 0 : index
    %41 = vector.load %arg11[%c0_34, %c0_35] : memref<1x32xf32, #tpu.memory_space<vmem>>, vector<1x32xf32>
    %42 = vector.broadcast %41 : vector<1x32xf32> to vector<8x32xf32>
    %43 = arith.addf %40, %42 : vector<8x32xf32>
    %cst_36 = arith.constant 0.000000e+00 : f32
    %44 = vector.broadcast %cst_36 : f32 to vector<8x32xf32>
    %45 = arith.maximumf %43, %44 : vector<8x32xf32>
    %46 = arith.truncf %45 : vector<8x32xf32> to vector<8x32xbf16>
    %c0_37 = arith.constant 0 : index
    %c0_38 = arith.constant 0 : index
    %47 = vector.load %arg12[%c0_37, %c0_38] : memref<32x16xbf16, #tpu.memory_space<vmem>>, vector<32x16xbf16>
    %cst_39 = arith.constant dense<0.000000e+00> : vector<8x16xf32>
    %48 = tpu.matmul %46, %47, %cst_39 {dimension_numbers = #tpu.dot_dimension_numbers<[1], [0], [0], [1], [0, 0, 1, 1], [], []>} : vector<8x32xbf16>, vector<32x16xbf16>, vector<8x16xf32> -> vector<8x16xf32>
    %c0_40 = arith.constant 0 : index
    %c0_41 = arith.constant 0 : index
    %49 = vector.load %arg13[%c0_40, %c0_41] : memref<1x16xf32, #tpu.memory_space<vmem>>, vector<1x16xf32>
    %50 = vector.broadcast %49 : vector<1x16xf32> to vector<8x16xf32>
    %51 = arith.addf %48, %50 : vector<8x16xf32>
    %cst_42 = arith.constant 0.000000e+00 : f32
    %52 = vector.broadcast %cst_42 : f32 to vector<8x16xf32>
    %53 = arith.maximumf %51, %52 : vector<8x16xf32>
    %54 = arith.truncf %53 : vector<8x16xf32> to vector<8x16xbf16>
    %c0_43 = arith.constant 0 : index
    %c0_44 = arith.constant 0 : index
    %55 = vector.load %arg1[%c0_43, %c0_44] : memref<8x128xbf16, #tpu.memory_space<vmem>>, vector<8x128xbf16>
    %c0_45 = arith.constant 0 : index
    %c0_46 = arith.constant 0 : index
    %56 = vector.load %arg3[%c0_45, %c0_46] : memref<8x128xbf16, #tpu.memory_space<vmem>>, vector<8x128xbf16>
    %57 = arith.mulf %55, %56 : vector<8x128xbf16>
    %c0_47 = arith.constant 0 : index
    %c0_48 = arith.constant 0 : index
    %58 = vector.load %arg1[%c0_47, %c0_48] : memref<8x128xbf16, #tpu.memory_space<vmem>>, vector<8x128xbf16>
    %c0_49 = arith.constant 0 : index
    %c0_50 = arith.constant 0 : index
    %59 = vector.load %arg5[%c0_49, %c0_50] : memref<8x128xbf16, #tpu.memory_space<vmem>>, vector<8x128xbf16>
    %60 = arith.mulf %58, %59 : vector<8x128xbf16>
    %c0_51 = arith.constant 0 : index
    %c0_52 = arith.constant 0 : index
    %61 = vector.load %arg14[%c0_51, %c0_52] : memref<1x128xbf16, #tpu.memory_space<vmem>>, vector<1x128xbf16>
    %cst_53 = arith.constant dense<0.000000e+00> : vector<1x8xf32>
    %62 = tpu.matmul %61, %57, %cst_53 {dimension_numbers = #tpu.dot_dimension_numbers<[1], [1], [0], [0], [0, 0, 1, 0], [], []>} : vector<1x128xbf16>, vector<8x128xbf16>, vector<1x8xf32> -> vector<1x8xf32>
    %c0_54 = arith.constant 0 : index
    %c0_55 = arith.constant 0 : index
    %63 = vector.load %arg15[%c0_54, %c0_55] : memref<1x16xbf16, #tpu.memory_space<vmem>>, vector<1x16xbf16>
    %cst_56 = arith.constant dense<0.000000e+00> : vector<1x8xf32>
    %64 = tpu.matmul %63, %28, %cst_56 {dimension_numbers = #tpu.dot_dimension_numbers<[1], [1], [0], [0], [0, 0, 1, 0], [], []>} : vector<1x16xbf16>, vector<8x16xbf16>, vector<1x8xf32> -> vector<1x8xf32>
    %65 = arith.addf %62, %64 : vector<1x8xf32>
    %c0_57 = arith.constant 0 : index
    %c0_58 = arith.constant 0 : index
    %66 = vector.load %arg16[%c0_57, %c0_58] : memref<1x1xf32, #tpu.memory_space<vmem>>, vector<1x1xf32>
    %67 = vector.broadcast %66 : vector<1x1xf32> to vector<1x8xf32>
    %68 = arith.addf %65, %67 : vector<1x8xf32>
    %c0_59 = arith.constant 0 : index
    %c0_60 = arith.constant 0 : index
    %69 = vector.load %arg14[%c0_59, %c0_60] : memref<1x128xbf16, #tpu.memory_space<vmem>>, vector<1x128xbf16>
    %cst_61 = arith.constant dense<0.000000e+00> : vector<1x8xf32>
    %70 = tpu.matmul %69, %60, %cst_61 {dimension_numbers = #tpu.dot_dimension_numbers<[1], [1], [0], [0], [0, 0, 1, 0], [], []>} : vector<1x128xbf16>, vector<8x128xbf16>, vector<1x8xf32> -> vector<1x8xf32>
    %c0_62 = arith.constant 0 : index
    %c0_63 = arith.constant 0 : index
    %71 = vector.load %arg15[%c0_62, %c0_63] : memref<1x16xbf16, #tpu.memory_space<vmem>>, vector<1x16xbf16>
    %cst_64 = arith.constant dense<0.000000e+00> : vector<1x8xf32>
    %72 = tpu.matmul %71, %54, %cst_64 {dimension_numbers = #tpu.dot_dimension_numbers<[1], [1], [0], [0], [0, 0, 1, 0], [], []>} : vector<1x16xbf16>, vector<8x16xbf16>, vector<1x8xf32> -> vector<1x8xf32>
    %73 = arith.addf %70, %72 : vector<1x8xf32>
    %c0_65 = arith.constant 0 : index
    %c0_66 = arith.constant 0 : index
    %74 = vector.load %arg16[%c0_65, %c0_66] : memref<1x1xf32, #tpu.memory_space<vmem>>, vector<1x1xf32>
    %75 = vector.broadcast %74 : vector<1x1xf32> to vector<1x8xf32>
    %76 = arith.addf %73, %75 : vector<1x8xf32>
    %77 = tpu.concatenate %68, %76 in 0 : vector<1x8xf32>, vector<1x8xf32> -> vector<2x8xf32>
    %c0_67 = arith.constant 0 : index
    %c0_68 = arith.constant 0 : index
    %78 = vector.load %arg17[%c0_67, %c0_68] : memref<2x8xf32, #tpu.memory_space<vmem>>, vector<2x8xf32>
    tpu.vector_store %arg17[%c0_67, %c0_68], %77 {strides = array<i32>} : memref<2x8xf32, #tpu.memory_space<vmem>>, vector<2x8xf32>,
    return
  }
  func.func @transform_0(%arg0: i32) -> (i32, i32) {
    %c0_i32 = arith.constant 0 : i32
    %c0_i32_0 = arith.constant 0 : i32
    return %arg0, %c0_i32 : i32, i32
  }
  func.func @transform_1(%arg0: i32) -> (i32, i32) {
    %c0_i32 = arith.constant 0 : i32
    %c0_i32_0 = arith.constant 0 : i32
    return %arg0, %c0_i32 : i32, i32
  }
  func.func @transform_2(%arg0: i32) -> (i32, i32) {
    %c0_i32 = arith.constant 0 : i32
    %c0_i32_0 = arith.constant 0 : i32
    return %arg0, %c0_i32 : i32, i32
  }
  func.func @transform_3(%arg0: i32) -> (i32, i32) {
    %c0_i32 = arith.constant 0 : i32
    %c0_i32_0 = arith.constant 0 : i32
    return %arg0, %c0_i32 : i32, i32
  }
  func.func @transform_4(%arg0: i32) -> (i32, i32) {
    %c0_i32 = arith.constant 0 : i32
    %c0_i32_0 = arith.constant 0 : i32
    return %arg0, %c0_i32 : i32, i32
  }
  func.func @transform_5(%arg0: i32) -> (i32, i32) {
    %c0_i32 = arith.constant 0 : i32
    %c0_i32_0 = arith.constant 0 : i32
    return %arg0, %c0_i32 : i32, i32
  }
  func.func @transform_6(%arg0: i32) -> (i32, i32) {
    %c0_i32 = arith.constant 0 : i32
    %c0_i32_0 = arith.constant 0 : i32
    %c0_i32_1 = arith.constant 0 : i32
    return %c0_i32, %c0_i32_0 : i32, i32
  }
  func.func @transform_7(%arg0: i32) -> (i32, i32) {
    %c0_i32 = arith.constant 0 : i32
    %c0_i32_0 = arith.constant 0 : i32
    %c0_i32_1 = arith.constant 0 : i32
    return %c0_i32, %c0_i32_0 : i32, i32
  }
  func.func @transform_8(%arg0: i32) -> (i32, i32) {
    %c0_i32 = arith.constant 0 : i32
    %c0_i32_0 = arith.constant 0 : i32
    %c0_i32_1 = arith.constant 0 : i32
    return %c0_i32, %c0_i32_0 : i32, i32
  }
  func.func @transform_9(%arg0: i32) -> (i32, i32) {
    %c0_i32 = arith.constant 0 : i32
    %c0_i32_0 = arith.constant 0 : i32
    %c0_i32_1 = arith.constant 0 : i32
    return %c0_i32, %c0_i32_0 : i32, i32
  }
  func.func @transform_10(%arg0: i32) -> (i32, i32) {
    %c0_i32 = arith.constant 0 : i32
    %c0_i32_0 = arith.constant 0 : i32
    %c0_i32_1 = arith.constant 0 : i32
    return %c0_i32, %c0_i32_0 : i32, i32
  }
  func.func @transform_11(%arg0: i32) -> (i32, i32) {
    %c0_i32 = arith.constant 0 : i32
    %c0_i32_0 = arith.constant 0 : i32
    %c0_i32_1 = arith.constant 0 : i32
    return %c0_i32, %c0_i32_0 : i32, i32
  }
  func.func @transform_12(%arg0: i32) -> (i32, i32) {
    %c0_i32 = arith.constant 0 : i32
    %c0_i32_0 = arith.constant 0 : i32
    %c0_i32_1 = arith.constant 0 : i32
    return %c0_i32, %c0_i32_0 : i32, i32
  }
  func.func @transform_13(%arg0: i32) -> (i32, i32) {
    %c0_i32 = arith.constant 0 : i32
    %c0_i32_0 = arith.constant 0 : i32
    %c0_i32_1 = arith.constant 0 : i32
    return %c0_i32, %c0_i32_0 : i32, i32
  }
  func.func @transform_14(%arg0: i32) -> (i32, i32) {
    %c0_i32 = arith.constant 0 : i32
    %c0_i32_0 = arith.constant 0 : i32
    %c0_i32_1 = arith.constant 0 : i32
    return %c0_i32, %c0_i32_0 : i32, i32
  }
  func.func @transform_15(%arg0: i32) -> (i32, i32) {
    %c0_i32 = arith.constant 0 : i32
    %c0_i32_0 = arith.constant 0 : i32
    %c0_i32_1 = arith.constant 0 : i32
    return %c0_i32, %c0_i32_0 : i32, i32
  }
  func.func @transform_16(%arg0: i32) -> (i32, i32) {
    %c0_i32 = arith.constant 0 : i32
    %c0_i32_0 = arith.constant 0 : i32
    return %c0_i32, %arg0 : i32, i32
  }
}

</mosaic_0001>

<llo_original>
// kernel: neural_mf_forward.1
$region0: #{neural_mf_forward.1}
  #allocation0 [shape = 'u32[]', space=smem, size = 0x4, offset = 0x4, fixed_abs, tag = 'smem constant byte address 0x4 - core index']
  #allocation1 [shape = 'u32[144,128]{1,0:T(1,128)}', space=vmem, size = 0x12000, scoped, tag = 'internal scratch']
  #allocation2 [shape = 'f32[1,1]{1,0:T(1,128)S(1)}', space=vmem, size = 0x200, scoped, tag = 'scoped memory for neural_mf_forward.1']
  %s0 = inlined_call_operand.vmem [shape: bf16[8,128], index: 0, kind: input, shape index: {}]
  %s1 = inlined_call_operand.vmem [shape: bf16[8,128], index: 1, kind: input, shape index: {}]
  %s2 = inlined_call_operand.vmem [shape: bf16[8,128], index: 2, kind: input, shape index: {}]
  %s3 = inlined_call_operand.vmem [shape: bf16[8,128], index: 3, kind: input, shape index: {}]
  %s4 = inlined_call_operand.vmem [shape: bf16[8,128], index: 4, kind: input, shape index: {}]
  %s5 = inlined_call_operand.vmem [shape: bf16[8,128], index: 5, kind: input, shape index: {}]
  %s6 = inlined_call_operand.vmem [shape: bf16[128,64], index: 6, kind: input, shape index: {}]
  %s7 = inlined_call_operand.vmem [shape: bf16[128,64], index: 7, kind: input, shape index: {}]
  %s8 = inlined_call_operand.vmem [shape: f32[1,64], index: 8, kind: input, shape index: {}]
  %s9 = inlined_call_operand.vmem [shape: bf16[64,32], index: 9, kind: input, shape index: {}]
  %s10 = inlined_call_operand.vmem [shape: f32[1,32], index: 10, kind: input, shape index: {}]
  %s11 = inlined_call_operand.vmem [shape: bf16[32,16], index: 11, kind: input, shape index: {}]
  %s12 = inlined_call_operand.vmem [shape: f32[1,16], index: 12, kind: input, shape index: {}]
  %s13 = inlined_call_operand.vmem [shape: bf16[1,128], index: 13, kind: input, shape index: {}]
  %s14 = inlined_call_operand.vmem [shape: bf16[1,16], index: 14, kind: input, shape index: {}]
  %s15 = inlined_call_operand.<no memory space> [shape: f32[1,1], index: 15, kind: input, shape index: {}]
  %s16 = inlined_call_operand.vmem [shape: f32[2,8], index: 16, kind: output, shape index: {}]
  %s17 = sld [smem:[#allocation0]]
  $region74: #{neural_mf_forward.1} parent=0
    _
  %s19 = ssub.s32 1, %s17
  %s20 = scalar_select 0, %s19, %s17
  %v21 = vstv %s15
  %22 = vst [vmem:[#allocation2] sm:$0x1] %v21
  // Predicated region
  $region2: #{neural_mf_forward.1} parent=0 // pred_check
    _
  $region3: #{neural_mf_forward.1} parent=0 // pred_check_branch
    %24 = sbr.rel (0) target = $region5
  $region4: #{neural_mf_forward.1} parent=0 // pred_region
    _
  $region5: #{neural_mf_forward.1} parent=0 // pred_fallthru
    _
  // Predicated region
  $region6: #{neural_mf_forward.1} parent=0 // pred_check
    _
  $region7: #{neural_mf_forward.1} parent=0 // pred_check_branch
    %26 = sbr.rel (0) target = $region9
  $region8: #{neural_mf_forward.1} parent=0 // pred_region
    _
  $region9: #{neural_mf_forward.1} parent=0 // pred_fallthru
    _
  // Predicated region
  $region10: #{neural_mf_forward.1} parent=0 // pred_check
    _
  $region11: #{neural_mf_forward.1} parent=0 // pred_check_branch
    %28 = sbr.rel (0) target = $region13
  $region12: #{neural_mf_forward.1} parent=0 // pred_region
    _
  $region13: #{neural_mf_forward.1} parent=0 // pred_fallthru
    _
  // Predicated region
  $region14: #{neural_mf_forward.1} parent=0 // pred_check
    _
  $region15: #{neural_mf_forward.1} parent=0 // pred_check_branch
    %30 = sbr.rel (0) target = $region17
  $region16: #{neural_mf_forward.1} parent=0 // pred_region
    _
  $region17: #{neural_mf_forward.1} parent=0 // pred_fallthru
    _
  // Predicated region
  $region18: #{neural_mf_forward.1} parent=0 // pred_check
    _
  $region19: #{neural_mf_forward.1} parent=0 // pred_check_branch
    %32 = sbr.rel (0) target = $region21
  $region20: #{neural_mf_forward.1} parent=0 // pred_region
    _
  $region21: #{neural_mf_forward.1} parent=0 // pred_fallthru
    _
  // Predicated region
  $region22: #{neural_mf_forward.1} parent=0 // pred_check
    _
  $region23: #{neural_mf_forward.1} parent=0 // pred_check_branch
    %34 = sbr.rel (0) target = $region25
  $region24: #{neural_mf_forward.1} parent=0 // pred_region
    _
  $region25: #{neural_mf_forward.1} parent=0 // pred_fallthru
    _
  // Predicated region
  $region26: #{neural_mf_forward.1} parent=0 // pred_check
    _
  $region27: #{neural_mf_forward.1} parent=0 // pred_check_branch
    %36 = sbr.rel (0) target = $region29
  $region28: #{neural_mf_forward.1} parent=0 // pred_region
    _
  $region29: #{neural_mf_forward.1} parent=0 // pred_fallthru
    _
  // Predicated region
  $region30: #{neural_mf_forward.1} parent=0 // pred_check
    _
  $region31: #{neural_mf_forward.1} parent=0 // pred_check_branch
    %38 = sbr.rel (0) target = $region33
  $region32: #{neural_mf_forward.1} parent=0 // pred_region
    _
  $region33: #{neural_mf_forward.1} parent=0 // pred_fallthru
    _
  // Predicated region
  $region34: #{neural_mf_forward.1} parent=0 // pred_check
    _
  $region35: #{neural_mf_forward.1} parent=0 // pred_check_branch
    %40 = sbr.rel (0) target = $region37
  $region36: #{neural_mf_forward.1} parent=0 // pred_region
    _
  $region37: #{neural_mf_forward.1} parent=0 // pred_fallthru
    _
  // Predicated region
  $region38: #{neural_mf_forward.1} parent=0 // pred_check
    _
  $region39: #{neural_mf_forward.1} parent=0 // pred_check_branch
    %42 = sbr.rel (0) target = $region41
  $region40: #{neural_mf_forward.1} parent=0 // pred_region
    _
  $region41: #{neural_mf_forward.1} parent=0 // pred_fallthru
    _
  // Predicated region
  $region42: #{neural_mf_forward.1} parent=0 // pred_check
    _
  $region43: #{neural_mf_forward.1} parent=0 // pred_check_branch
    %44 = sbr.rel (0) target = $region45
  $region44: #{neural_mf_forward.1} parent=0 // pred_region
    _
  $region45: #{neural_mf_forward.1} parent=0 // pred_fallthru
    _
  // Predicated region
  $region46: #{neural_mf_forward.1} parent=0 // pred_check
    _
  $region47: #{neural_mf_forward.1} parent=0 // pred_check_branch
    %46 = sbr.rel (0) target = $region49
  $region48: #{neural_mf_forward.1} parent=0 // pred_region
    _
  $region49: #{neural_mf_forward.1} parent=0 // pred_fallthru
    _
  // Predicated region
  $region50: #{neural_mf_forward.1} parent=0 // pred_check
    _
  $region51: #{neural_mf_forward.1} parent=0 // pred_check_branch
    %48 = sbr.rel (0) target = $region53
  $region52: #{neural_mf_forward.1} parent=0 // pred_region
    _
  $region53: #{neural_mf_forward.1} parent=0 // pred_fallthru
    _
  // Predicated region
  $region54: #{neural_mf_forward.1} parent=0 // pred_check
    _
  $region55: #{neural_mf_forward.1} parent=0 // pred_check_branch
    %50 = sbr.rel (0) target = $region57
  $region56: #{neural_mf_forward.1} parent=0 // pred_region
    _
  $region57: #{neural_mf_forward.1} parent=0 // pred_fallthru
    _
  // Predicated region
  $region58: #{neural_mf_forward.1} parent=0 // pred_check
    _
  $region59: #{neural_mf_forward.1} parent=0 // pred_check_branch
    %52 = sbr.rel (0) target = $region61
  $region60: #{neural_mf_forward.1} parent=0 // pred_region
    _
  $region61: #{neural_mf_forward.1} parent=0 // pred_fallthru
    _
  // Predicated region
  $region62: #{neural_mf_forward.1} parent=0 // pred_check
    _
  $region63: #{neural_mf_forward.1} parent=0 // pred_check_branch
    %54 = sbr.rel (0) target = $region65
  $region64: #{neural_mf_forward.1} parent=0 // pred_region
    _
  $region65: #{neural_mf_forward.1} parent=0 // pred_fallthru
    _
  %v56 = vld [vmem:[%s1] sm:$0xf]
  %v57 = vld [vmem:[%s6] sm:$0xf]
  %v58 = vld [vmem:[%s6 + $0x4] sm:$0xf]
  %v59 = vld [vmem:[%s6 + $0x8] sm:$0xf]
  %v60 = vld [vmem:[%s6 + $0xc] sm:$0xf]
  %v61 = vld [vmem:[%s6 + $0x10] sm:$0xf]
  %v62 = vld [vmem:[%s6 + $0x14] sm:$0xf]
  %v63 = vld [vmem:[%s6 + $0x18] sm:$0xf]
  %v64 = vld [vmem:[%s6 + $0x1c] sm:$0xf]
  %v65 = vld [vmem:[%s6 + $0x20] sm:$0xf]
  %v66 = vld [vmem:[%s6 + $0x24] sm:$0xf]
  %v67 = vld [vmem:[%s6 + $0x28] sm:$0xf]
  %v68 = vld [vmem:[%s6 + $0x2c] sm:$0xf]
  %v69 = vld [vmem:[%s6 + $0x30] sm:$0xf]
  %v70 = vld [vmem:[%s6 + $0x34] sm:$0xf]
  %v71 = vld [vmem:[%s6 + $0x38] sm:$0xf]
  %v72 = vld [vmem:[%s6 + $0x3c] sm:$0xf]
  %v89 = vunpack.c.l.b16 %v57
  %v90 = vunpack.c.l.b16 %v58
  %v91 = vunpack.c.l.b16 %v59
  %v92 = vunpack.c.l.b16 %v60
  %v93 = vunpack.c.l.b16 %v61
  %v94 = vunpack.c.l.b16 %v62
  %v95 = vunpack.c.l.b16 %v63
  %v96 = vunpack.c.l.b16 %v64
  %v97 = vunpack.c.l.b16 %v65
  %v98 = vunpack.c.l.b16 %v66
  %v99 = vunpack.c.l.b16 %v67
  %v100 = vunpack.c.l.b16 %v68
  %v101 = vunpack.c.l.b16 %v69
  %v102 = vunpack.c.l.b16 %v70
  %v103 = vunpack.c.l.b16 %v71
  %v104 = vunpack.c.l.b16 %v72
  %v105 = vpack.c.b16 %v90, %v89
  %v106 = vpack.c.b16 %v92, %v91
  %v107 = vpack.c.b16 %v94, %v93
  %v108 = vpack.c.b16 %v96, %v95
  %v109 = vpack.c.b16 %v98, %v97
  %v110 = vpack.c.b16 %v100, %v99
  %v111 = vpack.c.b16 %v102, %v101
  %v112 = vpack.c.b16 %v104, %v103
  %121 = vmatprep.subr.bf16.mxu0 0
  %122 = vmatpush1.bf16.msra.mxu0 %v105
  %123 = vmatprep.subr.bf16.mxu0 0
  %124 = vmatpush1.bf16.msra.mxu0 %v106
  %125 = vmatprep.subr.bf16.mxu0 0
  %126 = vmatpush1.bf16.msra.mxu0 %v107
  %127 = vmatprep.subr.bf16.mxu0 0
  %128 = vmatpush1.bf16.msra.mxu0 %v108
  %129 = vmatprep.subr.bf16.mxu0 0
  %130 = vmatpush1.bf16.msra.mxu0 %v109
  %131 = vmatprep.subr.bf16.mxu0 0
  %132 = vmatpush1.bf16.msra.mxu0 %v110
  %133 = vmatprep.subr.bf16.mxu0 0
  %134 = vmatpush1.bf16.msra.mxu0 %v111
  %135 = vmatprep.subr.bf16.mxu0 0
  %136 = vmatpush1.bf16.msra.mxu0 %v112
  %137 = vmatprep.subr.bf16.mxu0 0
  %138 = vmatpush1.bf16.msra.mxu0 0
  %139 = vmatprep.subr.bf16.mxu0 0
  %140 = vmatpush1.bf16.msra.mxu0 0
  %141 = vmatprep.subr.bf16.mxu0 0
  %142 = vmatpush1.bf16.msra.mxu0 0
  %143 = vmatprep.subr.bf16.mxu0 0
  %144 = vmatpush1.bf16.msra.mxu0 0
  %145 = vmatprep.subr.bf16.mxu0 0
  %146 = vmatpush1.bf16.msra.mxu0 0
  %147 = vmatprep.subr.bf16.mxu0 0
  %148 = vmatpush1.bf16.msra.mxu0 0
  %149 = vmatprep.subr.bf16.mxu0 0
  %150 = vmatpush1.bf16.msra.mxu0 0
  %151 = vmatprep.subr.bf16.mxu0 0
  %152 = vmatpush1.bf16.msra.mxu0 0
  %153 = vmatprep.mubr.bf16.mxu0 0
  %154 = vmatmul.mubr.bf16.gmra.mrb[0].mxu0 %v56
  %v155 = vpop.f32.mrb[0].mxu0
  %v156 = vadd.f32 0.0, %v155
  %v157 = vpop.f32.mrb[0].mxu0
  %v158 = vpop.f32.mrb[0].mxu0
  %v159 = vpop.f32.mrb[0].mxu0
  %160 = vdwg.mxu0
  %v161 = vld [vmem:[%s3] sm:$0xf]
  %v162 = vld [vmem:[%s7] sm:$0xf]
  %v163 = vld [vmem:[%s7 + $0x4] sm:$0xf]
  %v164 = vld [vmem:[%s7 + $0x8] sm:$0xf]
  %v165 = vld [vmem:[%s7 + $0xc] sm:$0xf]
  %v166 = vld [vmem:[%s7 + $0x10] sm:$0xf]
  %v167 = vld [vmem:[%s7 + $0x14] sm:$0xf]
  %v168 = vld [vmem:[%s7 + $0x18] sm:$0xf]
  %v169 = vld [vmem:[%s7 + $0x1c] sm:$0xf]
  %v170 = vld [vmem:[%s7 + $0x20] sm:$0xf]
  %v171 = vld [vmem:[%s7 + $0x24] sm:$0xf]
  %v172 = vld [vmem:[%s7 + $0x28] sm:$0xf]
  %v173 = vld [vmem:[%s7 + $0x2c] sm:$0xf]
  %v174 = vld [vmem:[%s7 + $0x30] sm:$0xf]
  %v175 = vld [vmem:[%s7 + $0x34] sm:$0xf]
  %v176 = vld [vmem:[%s7 + $0x38] sm:$0xf]
  %v177 = vld [vmem:[%s7 + $0x3c] sm:$0xf]
  %v194 = vunpack.c.l.b16 %v162
  %v195 = vunpack.c.l.b16 %v163
  %v196 = vunpack.c.l.b16 %v164
  %v197 = vunpack.c.l.b16 %v165
  %v198 = vunpack.c.l.b16 %v166
  %v199 = vunpack.c.l.b16 %v167
  %v200 = vunpack.c.l.b16 %v168
  %v201 = vunpack.c.l.b16 %v169
  %v202 = vunpack.c.l.b16 %v170
  %v203 = vunpack.c.l.b16 %v171
  %v204 = vunpack.c.l.b16 %v172
  %v205 = vunpack.c.l.b16 %v173
  %v206 = vunpack.c.l.b16 %v174
  %v207 = vunpack.c.l.b16 %v175
  %v208 = vunpack.c.l.b16 %v176
  %v209 = vunpack.c.l.b16 %v177
  %v210 = vpack.c.b16 %v195, %v194
  %v211 = vpack.c.b16 %v197, %v196
  %v212 = vpack.c.b16 %v199, %v198
  %v213 = vpack.c.b16 %v201, %v200
  %v214 = vpack.c.b16 %v203, %v202
  %v215 = vpack.c.b16 %v205, %v204
  %v216 = vpack.c.b16 %v207, %v206
  %v217 = vpack.c.b16 %v209, %v208
  %226 = vmatprep.subr.bf16.mxu0 0
  %227 = vmatpush1.bf16.msra.mxu0 %v210
  %228 = vmatprep.subr.bf16.mxu0 0
  %229 = vmatpush1.bf16.msra.mxu0 %v211
  %230 = vmatprep.subr.bf16.mxu0 0
  %231 = vmatpush1.bf16.msra.mxu0 %v212
  %232 = vmatprep.subr.bf16.mxu0 0
  %233 = vmatpush1.bf16.msra.mxu0 %v213
  %234 = vmatprep.subr.bf16.mxu0 0
  %235 = vmatpush1.bf16.msra.mxu0 %v214
  %236 = vmatprep.subr.bf16.mxu0 0
  %237 = vmatpush1.bf16.msra.mxu0 %v215
  %238 = vmatprep.subr.bf16.mxu0 0
  %239 = vmatpush1.bf16.msra.mxu0 %v216
  %240 = vmatprep.subr.bf16.mxu0 0
  %241 = vmatpush1.bf16.msra.mxu0 %v217
  %242 = vmatprep.subr.bf16.mxu0 0
  %243 = vmatpush1.bf16.msra.mxu0 0
  %244 = vmatprep.subr.bf16.mxu0 0
  %245 = vmatpush1.bf16.msra.mxu0 0
  %246 = vmatprep.subr.bf16.mxu0 0
  %247 = vmatpush1.bf16.msra.mxu0 0
  %248 = vmatprep.subr.bf16.mxu0 0
  %249 = vmatpush1.bf16.msra.mxu0 0
  %250 = vmatprep.subr.bf16.mxu0 0
  %251 = vmatpush1.bf16.msra.mxu0 0
  %252 = vmatprep.subr.bf16.mxu0 0
  %253 = vmatpush1.bf16.msra.mxu0 0
  %254 = vmatprep.subr.bf16.mxu0 0
  %255 = vmatpush1.bf16.msra.mxu0 0
  %256 = vmatprep.subr.bf16.mxu0 0
  %257 = vmatpush1.bf16.msra.mxu0 0
  %258 = vmatprep.mubr.bf16.mxu0 0
  %259 = vmatmul.mubr.bf16.gmra.mrb[0].mxu0 %v161
  %v260 = vpop.f32.mrb[0].mxu0
  %v261 = vadd.f32 0.0, %v260
  %v262 = vpop.f32.mrb[0].mxu0
  %v263 = vpop.f32.mrb[0].mxu0
  %v264 = vpop.f32.mrb[0].mxu0
  %265 = vdwg.mxu0
  %v266 = vadd.f32 %v156, %v261
  %v267 = vld [vmem:[%s8] sm:$0x1]
  %v269 = vlaneseq
  %v270 = vshrl.u32 %v269, 7
  %v271 = vsub.s32 0, %v270
  %v272 = vrot.slane %v267, %v271
  %v274 = vadd.f32 %v266, %v272
  %v275 = vmax.f32 %v274, 0.0
  %v276 = vpack.c.bf16 %v275, %v275
  %v277 = vld [vmem:[%s9] sm:$0xf]
  %v278 = vld [vmem:[%s9 + $0x4] sm:$0xf]
  %v279 = vld [vmem:[%s9 + $0x8] sm:$0xf]
  %v280 = vld [vmem:[%s9 + $0xc] sm:$0xf]
  %v281 = vld [vmem:[%s9 + $0x10] sm:$0xf]
  %v282 = vld [vmem:[%s9 + $0x14] sm:$0xf]
  %v283 = vld [vmem:[%s9 + $0x18] sm:$0xf]
  %v284 = vld [vmem:[%s9 + $0x1c] sm:$0xf]
  %v285 = vld [vmem:[%s10] sm:$0x1]
  %v287 = vlaneseq
  %v288 = vshrl.u32 %v287, 7
  %v289 = vsub.s32 0, %v288
  %v290 = vrot.slane %v285, %v289
  %v300 = vunpack.c.l.b16 %v277
  %v301 = vunpack.c.l.b16 %v278
  %v302 = vunpack.c.l.b16 %v279
  %v303 = vunpack.c.l.b16 %v280
  %v304 = vunpack.c.l.b16 %v281
  %v305 = vunpack.c.l.b16 %v282
  %v306 = vunpack.c.l.b16 %v283
  %v307 = vunpack.c.l.b16 %v284
  %v308 = vpack.c.b16 %v301, %v300
  %v309 = vpack.c.b16 %v303, %v302
  %v310 = vpack.c.b16 %v305, %v304
  %v311 = vpack.c.b16 %v307, %v306
  %vm316 = vcmask 523264
  %v318 = vsel %vm316, %v276, 0
  %320 = vmatprep.subr.bf16.mxu0 0
  %321 = vmatpush1.bf16.msra.mxu0 %v308
  %322 = vmatprep.subr.bf16.mxu0 0
  %323 = vmatpush1.bf16.msra.mxu0 %v309
  %324 = vmatprep.subr.bf16.mxu0 0
  %325 = vmatpush1.bf16.msra.mxu0 %v310
  %326 = vmatprep.subr.bf16.mxu0 0
  %327 = vmatpush1.bf16.msra.mxu0 %v311
  %328 = vmatprep.subr.bf16.mxu0 0
  %329 = vmatpush1.bf16.msra.mxu0 0
  %330 = vmatprep.subr.bf16.mxu0 0
  %331 = vmatpush1.bf16.msra.mxu0 0
  %332 = vmatprep.subr.bf16.mxu0 0
  %333 = vmatpush1.bf16.msra.mxu0 0
  %334 = vmatprep.subr.bf16.mxu0 0
  %335 = vmatpush1.bf16.msra.mxu0 0
  %336 = vmatprep.subr.bf16.mxu0 0
  %337 = vmatpush1.bf16.msra.mxu0 0
  %338 = vmatprep.subr.bf16.mxu0 0
  %339 = vmatpush1.bf16.msra.mxu0 0
  %340 = vmatprep.subr.bf16.mxu0 0
  %341 = vmatpush1.bf16.msra.mxu0 0
  %342 = vmatprep.subr.bf16.mxu0 0
  %343 = vmatpush1.bf16.msra.mxu0 0
  %344 = vmatprep.subr.bf16.mxu0 0
  %345 = vmatpush1.bf16.msra.mxu0 0
  %346 = vmatprep.subr.bf16.mxu0 0
  %347 = vmatpush1.bf16.msra.mxu0 0
  %348 = vmatprep.subr.bf16.mxu0 0
  %349 = vmatpush1.bf16.msra.mxu0 0
  %350 = vmatprep.subr.bf16.mxu0 0
  %351 = vmatpush1.bf16.msra.mxu0 0
  %352 = vmatprep.mubr.bf16.mxu0 0
  %353 = vmatmul.mubr.bf16.gmra.mrb[0].mxu0 %v318
  %v354 = vpop.f32.mrb[0].mxu0
  %v355 = vadd.f32 %v290, %v354
  %v356 = vpop.f32.mrb[0].mxu0
  %v357 = vpop.f32.mrb[0].mxu0
  %v358 = vpop.f32.mrb[0].mxu0
  %359 = vdwg.mxu0
  %v360 = vmax.f32 %v355, 0.0
  %v361 = vpack.c.bf16 %v360, %v360
  %v362 = vld [vmem:[%s11] sm:$0xf]
  %v363 = vld [vmem:[%s11 + $0x4] sm:$0xf]
  %v364 = vld [vmem:[%s11 + $0x8] sm:$0xf]
  %v365 = vld [vmem:[%s11 + $0xc] sm:$0xf]
  %v366 = vld [vmem:[%s12] sm:$0x1]
  %v368 = vlaneseq
  %v369 = vshrl.u32 %v368, 7
  %v370 = vsub.s32 0, %v369
  %v371 = vrot.slane %v366, %v370
  %v377 = vunpack.c.l.b16 %v362
  %v378 = vunpack.c.l.b16 %v363
  %v379 = vunpack.c.l.b16 %v364
  %v380 = vunpack.c.l.b16 %v365
  %v381 = vpack.c.b16 %v378, %v377
  %v382 = vpack.c.b16 %v380, %v379
  %vm385 = vcmask 261120
  %v387 = vsel %vm385, %v361, 0
  %389 = vmatprep.subr.bf16.mxu0 0
  %390 = vmatpush1.bf16.msra.mxu0 %v381
  %391 = vmatprep.subr.bf16.mxu0 0
  %392 = vmatpush1.bf16.msra.mxu0 %v382
  %393 = vmatprep.subr.bf16.mxu0 0
  %394 = vmatpush1.bf16.msra.mxu0 0
  %395 = vmatprep.subr.bf16.mxu0 0
  %396 = vmatpush1.bf16.msra.mxu0 0
  %397 = vmatprep.subr.bf16.mxu0 0
  %398 = vmatpush1.bf16.msra.mxu0 0
  %399 = vmatprep.subr.bf16.mxu0 0
  %400 = vmatpush1.bf16.msra.mxu0 0
  %401 = vmatprep.subr.bf16.mxu0 0
  %402 = vmatpush1.bf16.msra.mxu0 0
  %403 = vmatprep.subr.bf16.mxu0 0
  %404 = vmatpush1.bf16.msra.mxu0 0
  %405 = vmatprep.subr.bf16.mxu0 0
  %406 = vmatpush1.bf16.msra.mxu0 0
  %407 = vmatprep.subr.bf16.mxu0 0
  %408 = vmatpush1.bf16.msra.mxu0 0
  %409 = vmatprep.subr.bf16.mxu0 0
  %410 = vmatpush1.bf16.msra.mxu0 0
  %411 = vmatprep.subr.bf16.mxu0 0
  %412 = vmatpush1.bf16.msra.mxu0 0
  %413 = vmatprep.subr.bf16.mxu0 0
  %414 = vmatpush1.bf16.msra.mxu0 0
  %415 = vmatprep.subr.bf16.mxu0 0
  %416 = vmatpush1.bf16.msra.mxu0 0
  %417 = vmatprep.subr.bf16.mxu0 0
  %418 = vmatpush1.bf16.msra.mxu0 0
  %419 = vmatprep.subr.bf16.mxu0 0
  %420 = vmatpush1.bf16.msra.mxu0 0
  %421 = vmatprep.mubr.bf16.mxu0 0
  %422 = vmatmul.mubr.bf16.gmra.mrb[0].mxu0 %v387
  %v423 = vpop.f32.mrb[0].mxu0
  %v424 = vadd.f32 %v371, %v423
  %v425 = vpop.f32.mrb[0].mxu0
  %v426 = vpop.f32.mrb[0].mxu0
  %v427 = vpop.f32.mrb[0].mxu0
  %428 = vdwg.mxu0
  %v429 = vmax.f32 %v424, 0.0
  %v430 = vpack.c.bf16 %v429, %v429
  %v431 = vld [vmem:[%s5] sm:$0xf]
  %432 = vmatprep.subr.bf16.mxu0 0
  %433 = vmatpush1.bf16.msra.mxu0 %v210
  %434 = vmatprep.subr.bf16.mxu0 0
  %435 = vmatpush1.bf16.msra.mxu0 %v211
  %436 = vmatprep.subr.bf16.mxu0 0
  %437 = vmatpush1.bf16.msra.mxu0 %v212
  %438 = vmatprep.subr.bf16.mxu0 0
  %439 = vmatpush1.bf16.msra.mxu0 %v213
  %440 = vmatprep.subr.bf16.mxu0 0
  %441 = vmatpush1.bf16.msra.mxu0 %v214
  %442 = vmatprep.subr.bf16.mxu0 0
  %443 = vmatpush1.bf16.msra.mxu0 %v215
  %444 = vmatprep.subr.bf16.mxu0 0
  %445 = vmatpush1.bf16.msra.mxu0 %v216
  %446 = vmatprep.subr.bf16.mxu0 0
  %447 = vmatpush1.bf16.msra.mxu0 %v217
  %448 = vmatprep.subr.bf16.mxu0 0
  %449 = vmatpush1.bf16.msra.mxu0 0
  %450 = vmatprep.subr.bf16.mxu0 0
  %451 = vmatpush1.bf16.msra.mxu0 0
  %452 = vmatprep.subr.bf16.mxu0 0
  %453 = vmatpush1.bf16.msra.mxu0 0
  %454 = vmatprep.subr.bf16.mxu0 0
  %455 = vmatpush1.bf16.msra.mxu0 0
  %456 = vmatprep.subr.bf16.mxu0 0
  %457 = vmatpush1.bf16.msra.mxu0 0
  %458 = vmatprep.subr.bf16.mxu0 0
  %459 = vmatpush1.bf16.msra.mxu0 0
  %460 = vmatprep.subr.bf16.mxu0 0
  %461 = vmatpush1.bf16.msra.mxu0 0
  %462 = vmatprep.subr.bf16.mxu0 0
  %463 = vmatpush1.bf16.msra.mxu0 0
  %464 = vmatprep.mubr.bf16.mxu0 0
  %465 = vmatmul.mubr.bf16.gmra.mrb[0].mxu0 %v431
  %v466 = vpop.f32.mrb[0].mxu0
  %v467 = vadd.f32 0.0, %v466
  %v468 = vpop.f32.mrb[0].mxu0
  %v469 = vpop.f32.mrb[0].mxu0
  %v470 = vpop.f32.mrb[0].mxu0
  %471 = vdwg.mxu0
  %v472 = vadd.f32 %v156, %v467
  %v473 = vadd.f32 %v472, %v272
  %v474 = vmax.f32 %v473, 0.0
  %v475 = vpack.c.bf16 %v474, %v474
  %v477 = vsel %vm316, %v475, 0
  %479 = vmatprep.subr.bf16.mxu0 0
  %480 = vmatpush1.bf16.msra.mxu0 %v308
  %481 = vmatprep.subr.bf16.mxu0 0
  %482 = vmatpush1.bf16.msra.mxu0 %v309
  %483 = vmatprep.subr.bf16.mxu0 0
  %484 = vmatpush1.bf16.msra.mxu0 %v310
  %485 = vmatprep.subr.bf16.mxu0 0
  %486 = vmatpush1.bf16.msra.mxu0 %v311
  %487 = vmatprep.subr.bf16.mxu0 0
  %488 = vmatpush1.bf16.msra.mxu0 0
  %489 = vmatprep.subr.bf16.mxu0 0
  %490 = vmatpush1.bf16.msra.mxu0 0
  %491 = vmatprep.subr.bf16.mxu0 0
  %492 = vmatpush1.bf16.msra.mxu0 0
  %493 = vmatprep.subr.bf16.mxu0 0
  %494 = vmatpush1.bf16.msra.mxu0 0
  %495 = vmatprep.subr.bf16.mxu0 0
  %496 = vmatpush1.bf16.msra.mxu0 0
  %497 = vmatprep.subr.bf16.mxu0 0
  %498 = vmatpush1.bf16.msra.mxu0 0
  %499 = vmatprep.subr.bf16.mxu0 0
  %500 = vmatpush1.bf16.msra.mxu0 0
  %501 = vmatprep.subr.bf16.mxu0 0
  %502 = vmatpush1.bf16.msra.mxu0 0
  %503 = vmatprep.subr.bf16.mxu0 0
  %504 = vmatpush1.bf16.msra.mxu0 0
  %505 = vmatprep.subr.bf16.mxu0 0
  %506 = vmatpush1.bf16.msra.mxu0 0
  %507 = vmatprep.subr.bf16.mxu0 0
  %508 = vmatpush1.bf16.msra.mxu0 0
  %509 = vmatprep.subr.bf16.mxu0 0
  %510 = vmatpush1.bf16.msra.mxu0 0
  %511 = vmatprep.mubr.bf16.mxu0 0
  %512 = vmatmul.mubr.bf16.gmra.mrb[0].mxu0 %v477
  %v513 = vpop.f32.mrb[0].mxu0
  %v514 = vadd.f32 %v290, %v513
  %v515 = vpop.f32.mrb[0].mxu0
  %v516 = vpop.f32.mrb[0].mxu0
  %v517 = vpop.f32.mrb[0].mxu0
  %518 = vdwg.mxu0
  %v519 = vmax.f32 %v514, 0.0
  %v520 = vpack.c.bf16 %v519, %v519
  %v522 = vsel %vm385, %v520, 0
  %524 = vmatprep.subr.bf16.mxu0 0
  %525 = vmatpush1.bf16.msra.mxu0 %v381
  %526 = vmatprep.subr.bf16.mxu0 0
  %527 = vmatpush1.bf16.msra.mxu0 %v382
  %528 = vmatprep.subr.bf16.mxu0 0
  %529 = vmatpush1.bf16.msra.mxu0 0
  %530 = vmatprep.subr.bf16.mxu0 0
  %531 = vmatpush1.bf16.msra.mxu0 0
  %532 = vmatprep.subr.bf16.mxu0 0
  %533 = vmatpush1.bf16.msra.mxu0 0
  %534 = vmatprep.subr.bf16.mxu0 0
  %535 = vmatpush1.bf16.msra.mxu0 0
  %536 = vmatprep.subr.bf16.mxu0 0
  %537 = vmatpush1.bf16.msra.mxu0 0
  %538 = vmatprep.subr.bf16.mxu0 0
  %539 = vmatpush1.bf16.msra.mxu0 0
  %540 = vmatprep.subr.bf16.mxu0 0
  %541 = vmatpush1.bf16.msra.mxu0 0
  %542 = vmatprep.subr.bf16.mxu0 0
  %543 = vmatpush1.bf16.msra.mxu0 0
  %544 = vmatprep.subr.bf16.mxu0 0
  %545 = vmatpush1.bf16.msra.mxu0 0
  %546 = vmatprep.subr.bf16.mxu0 0
  %547 = vmatpush1.bf16.msra.mxu0 0
  %548 = vmatprep.subr.bf16.mxu0 0
  %549 = vmatpush1.bf16.msra.mxu0 0
  %550 = vmatprep.subr.bf16.mxu0 0
  %551 = vmatpush1.bf16.msra.mxu0 0
  %552 = vmatprep.subr.bf16.mxu0 0
  %553 = vmatpush1.bf16.msra.mxu0 0
  %554 = vmatprep.subr.bf16.mxu0 0
  %555 = vmatpush1.bf16.msra.mxu0 0
  %556 = vmatprep.mubr.bf16.mxu0 0
  %557 = vmatmul.mubr.bf16.gmra.mrb[0].mxu0 %v522
  %v558 = vpop.f32.mrb[0].mxu0
  %v559 = vadd.f32 %v371, %v558
  %v560 = vpop.f32.mrb[0].mxu0
  %v561 = vpop.f32.mrb[0].mxu0
  %v562 = vpop.f32.mrb[0].mxu0
  %563 = vdwg.mxu0
  %v564 = vmax.f32 %v559, 0.0
  %v565 = vpack.c.bf16 %v564, %v564
  %v566 = vld [vmem:[%s0] sm:$0xf]
  %v567 = vld [vmem:[%s2] sm:$0xf]
  %v568 = vmul.bf16 %v566, %v567
  %v569 = vld [vmem:[%s4] sm:$0xf]
  %v570 = vmul.bf16 %v566, %v569
  %v571 = vld [vmem:[%s13] sm:$0x1]
  %v572 = vld [vmem:[%s14] sm:$0x1]
  %vm573 = vcmask 130048
  %v575 = vsel %vm573, %v572, 0
  %v578 = vsel %vm573, %v430, 0
  %580 = vmatprep.subr.bf16.mxu0 0
  %581 = vmatpush1.bf16.xpose.msra.mxu0 %v578
  %582 = vmatprep.subr.bf16.mxu0 0
  %583 = vmatpush1.bf16.xpose.msra.mxu0 0
  %584 = vmatprep.subr.bf16.mxu0 0
  %585 = vmatpush1.bf16.xpose.msra.mxu0 0
  %586 = vmatprep.subr.bf16.mxu0 0
  %587 = vmatpush1.bf16.xpose.msra.mxu0 0
  %588 = vmatprep.subr.bf16.mxu0 0
  %589 = vmatpush1.bf16.xpose.msra.mxu0 0
  %590 = vmatprep.subr.bf16.mxu0 0
  %591 = vmatpush1.bf16.xpose.msra.mxu0 0
  %592 = vmatprep.subr.bf16.mxu0 0
  %593 = vmatpush1.bf16.xpose.msra.mxu0 0
  %594 = vmatprep.subr.bf16.mxu0 0
  %595 = vmatpush1.bf16.xpose.msra.mxu0 0
  %596 = vmatprep.subr.bf16.mxu0 0
  %597 = vmatpush1.bf16.xpose.msra.mxu0 0
  %598 = vmatprep.subr.bf16.mxu0 0
  %599 = vmatpush1.bf16.xpose.msra.mxu0 0
  %600 = vmatprep.subr.bf16.mxu0 0
  %601 = vmatpush1.bf16.xpose.msra.mxu0 0
  %602 = vmatprep.subr.bf16.mxu0 0
  %603 = vmatpush1.bf16.xpose.msra.mxu0 0
  %604 = vmatprep.subr.bf16.mxu0 0
  %605 = vmatpush1.bf16.xpose.msra.mxu0 0
  %606 = vmatprep.subr.bf16.mxu0 0
  %607 = vmatpush1.bf16.xpose.msra.mxu0 0
  %608 = vmatprep.subr.bf16.mxu0 0
  %609 = vmatpush1.bf16.xpose.msra.mxu0 0
  %610 = vmatprep.subr.bf16.mxu0 0
  %611 = vmatpush1.bf16.xpose.msra.mxu0 0
  %612 = vmatprep.mubr.bf16.mxu0 0
  %613 = vmatmul.mubr.bf16.gmra.mrb[0].mxu0 %v575
  %v614 = vpop.f32.mrb[0].mxu0
  %v615 = vadd.f32 0.0, %v614
  %v616 = vpop.f32.mrb[0].mxu0
  %v617 = vpop.f32.mrb[0].mxu0
  %v618 = vpop.f32.mrb[0].mxu0
  %619 = vdwg.mxu0
  %620 = vmatprep.subr.bf16.mxu0 0
  %621 = vmatpush1.bf16.xpose.msra.mxu0 %v568
  %622 = vmatprep.subr.bf16.mxu0 0
  %623 = vmatpush1.bf16.xpose.msra.mxu0 0
  %624 = vmatprep.subr.bf16.mxu0 0
  %625 = vmatpush1.bf16.xpose.msra.mxu0 0
  %626 = vmatprep.subr.bf16.mxu0 0
  %627 = vmatpush1.bf16.xpose.msra.mxu0 0
  %628 = vmatprep.subr.bf16.mxu0 0
  %629 = vmatpush1.bf16.xpose.msra.mxu0 0
  %630 = vmatprep.subr.bf16.mxu0 0
  %631 = vmatpush1.bf16.xpose.msra.mxu0 0
  %632 = vmatprep.subr.bf16.mxu0 0
  %633 = vmatpush1.bf16.xpose.msra.mxu0 0
  %634 = vmatprep.subr.bf16.mxu0 0
  %635 = vmatpush1.bf16.xpose.msra.mxu0 0
  %636 = vmatprep.subr.bf16.mxu0 0
  %637 = vmatpush1.bf16.xpose.msra.mxu0 0
  %638 = vmatprep.subr.bf16.mxu0 0
  %639 = vmatpush1.bf16.xpose.msra.mxu0 0
  %640 = vmatprep.subr.bf16.mxu0 0
  %641 = vmatpush1.bf16.xpose.msra.mxu0 0
  %642 = vmatprep.subr.bf16.mxu0 0
  %643 = vmatpush1.bf16.xpose.msra.mxu0 0
  %644 = vmatprep.subr.bf16.mxu0 0
  %645 = vmatpush1.bf16.xpose.msra.mxu0 0
  %646 = vmatprep.subr.bf16.mxu0 0
  %647 = vmatpush1.bf16.xpose.msra.mxu0 0
  %648 = vmatprep.subr.bf16.mxu0 0
  %649 = vmatpush1.bf16.xpose.msra.mxu0 0
  %650 = vmatprep.subr.bf16.mxu0 0
  %651 = vmatpush1.bf16.xpose.msra.mxu0 0
  %652 = vmatprep.mubr.bf16.mxu0 0
  %653 = vmatmul.mubr.bf16.gmra.mrb[0].mxu0 %v571
  %v654 = vpop.f32.mrb[0].mxu0
  %v655 = vadd.f32 %v615, %v654
  %v656 = vpop.f32.mrb[0].mxu0
  %v657 = vpop.f32.mrb[0].mxu0
  %v658 = vpop.f32.mrb[0].mxu0
  %659 = vdwg.mxu0
  %v660 = vld [vmem:[#allocation2] sm:$0x1]
  %662 = vset.pattern.permute.xlu0 0
  %663 = vperm.xlu0 %662, %v660
  %v664 = vpop.permute.xlu0 %663
  %v666 = vlaneseq
  %v667 = vshrl.u32 %v666, 7
  %v668 = vsub.s32 0, %v667
  %v669 = vrot.slane %v664, %v668
  %v670 = vadd.f32 %v655, %v669
  %v672 = vsel %vm573, %v565, 0
  %674 = vmatprep.subr.bf16.mxu0 0
  %675 = vmatpush1.bf16.xpose.msra.mxu0 %v672
  %676 = vmatprep.subr.bf16.mxu0 0
  %677 = vmatpush1.bf16.xpose.msra.mxu0 0
  %678 = vmatprep.subr.bf16.mxu0 0
  %679 = vmatpush1.bf16.xpose.msra.mxu0 0
  %680 = vmatprep.subr.bf16.mxu0 0
  %681 = vmatpush1.bf16.xpose.msra.mxu0 0
  %682 = vmatprep.subr.bf16.mxu0 0
  %683 = vmatpush1.bf16.xpose.msra.mxu0 0
  %684 = vmatprep.subr.bf16.mxu0 0
  %685 = vmatpush1.bf16.xpose.msra.mxu0 0
  %686 = vmatprep.subr.bf16.mxu0 0
  %687 = vmatpush1.bf16.xpose.msra.mxu0 0
  %688 = vmatprep.subr.bf16.mxu0 0
  %689 = vmatpush1.bf16.xpose.msra.mxu0 0
  %690 = vmatprep.subr.bf16.mxu0 0
  %691 = vmatpush1.bf16.xpose.msra.mxu0 0
  %692 = vmatprep.subr.bf16.mxu0 0
  %693 = vmatpush1.bf16.xpose.msra.mxu0 0
  %694 = vmatprep.subr.bf16.mxu0 0
  %695 = vmatpush1.bf16.xpose.msra.mxu0 0
  %696 = vmatprep.subr.bf16.mxu0 0
  %697 = vmatpush1.bf16.xpose.msra.mxu0 0
  %698 = vmatprep.subr.bf16.mxu0 0
  %699 = vmatpush1.bf16.xpose.msra.mxu0 0
  %700 = vmatprep.subr.bf16.mxu0 0
  %701 = vmatpush1.bf16.xpose.msra.mxu0 0
  %702 = vmatprep.subr.bf16.mxu0 0
  %703 = vmatpush1.bf16.xpose.msra.mxu0 0
  %704 = vmatprep.subr.bf16.mxu0 0
  %705 = vmatpush1.bf16.xpose.msra.mxu0 0
  %706 = vmatprep.mubr.bf16.mxu0 0
  %707 = vmatmul.mubr.bf16.gmra.mrb[0].mxu0 %v575
  %v708 = vpop.f32.mrb[0].mxu0
  %v709 = vadd.f32 0.0, %v708
  %v710 = vpop.f32.mrb[0].mxu0
  %v711 = vpop.f32.mrb[0].mxu0
  %v712 = vpop.f32.mrb[0].mxu0
  %713 = vdwg.mxu0
  %714 = vmatprep.subr.bf16.mxu0 0
  %715 = vmatpush1.bf16.xpose.msra.mxu0 %v570
  %716 = vmatprep.subr.bf16.mxu0 0
  %717 = vmatpush1.bf16.xpose.msra.mxu0 0
  %718 = vmatprep.subr.bf16.mxu0 0
  %719 = vmatpush1.bf16.xpose.msra.mxu0 0
  %720 = vmatprep.subr.bf16.mxu0 0
  %721 = vmatpush1.bf16.xpose.msra.mxu0 0
  %722 = vmatprep.subr.bf16.mxu0 0
  %723 = vmatpush1.bf16.xpose.msra.mxu0 0
  %724 = vmatprep.subr.bf16.mxu0 0
  %725 = vmatpush1.bf16.xpose.msra.mxu0 0
  %726 = vmatprep.subr.bf16.mxu0 0
  %727 = vmatpush1.bf16.xpose.msra.mxu0 0
  %728 = vmatprep.subr.bf16.mxu0 0
  %729 = vmatpush1.bf16.xpose.msra.mxu0 0
  %730 = vmatprep.subr.bf16.mxu0 0
  %731 = vmatpush1.bf16.xpose.msra.mxu0 0
  %732 = vmatprep.subr.bf16.mxu0 0
  %733 = vmatpush1.bf16.xpose.msra.mxu0 0
  %734 = vmatprep.subr.bf16.mxu0 0
  %735 = vmatpush1.bf16.xpose.msra.mxu0 0
  %736 = vmatprep.subr.bf16.mxu0 0
  %737 = vmatpush1.bf16.xpose.msra.mxu0 0
  %738 = vmatprep.subr.bf16.mxu0 0
  %739 = vmatpush1.bf16.xpose.msra.mxu0 0
  %740 = vmatprep.subr.bf16.mxu0 0
  %741 = vmatpush1.bf16.xpose.msra.mxu0 0
  %742 = vmatprep.subr.bf16.mxu0 0
  %743 = vmatpush1.bf16.xpose.msra.mxu0 0
  %744 = vmatprep.subr.bf16.mxu0 0
  %745 = vmatpush1.bf16.xpose.msra.mxu0 0
  %746 = vmatprep.mubr.bf16.mxu0 0
  %747 = vmatmul.mubr.bf16.gmra.mrb[0].mxu0 %v571
  %v748 = vpop.f32.mrb[0].mxu0
  %v749 = vadd.f32 %v709, %v748
  %v750 = vpop.f32.mrb[0].mxu0
  %v751 = vpop.f32.mrb[0].mxu0
  %v752 = vpop.f32.mrb[0].mxu0
  %753 = vdwg.mxu0
  %v754 = vadd.f32 %v749, %v669
  %v756 = vrot.slane %v754, 7
  %vm758 = vcmask 1040384
  %v759 = vsel %vm758, %v670, %v756
  %vm760 = vcmask 58368
  %761 = vst.msk [vmem:[%s16] sm:$0x3] %vm760, %v759
  // Predicated region
  $region66: #{neural_mf_forward.1} parent=0 // pred_check
    _
  $region67: #{neural_mf_forward.1} parent=0 // pred_check_branch
    %763 = sbr.rel (0) target = $region69
  $region68: #{neural_mf_forward.1} parent=0 // pred_region
    _
  $region69: #{neural_mf_forward.1} parent=0 // pred_fallthru
    _
  // Predicated region
  $region70: #{neural_mf_forward.1} parent=0 // pred_check
    _
  $region71: #{neural_mf_forward.1} parent=0 // pred_check_branch
    %765 = sbr.rel (0) target = $region73
  $region72: #{neural_mf_forward.1} parent=0 // pred_region
    _
  $region73: #{neural_mf_forward.1} parent=0 // pred_fallthru
    _

</llo_original>
